<compile_context>
chip_gen: v7x
topology: tpu7x:2x2x1
jax: 0.10.0
libtpu: 0.0.40
codegen_flags: <defaults>
</compile_context>

<pallas_src>
import functools

import numpy as np

import jax
import jax.numpy as jnp
from jax.experimental import pallas as pl
from jax.experimental.pallas import tpu as pltpu


def _round_up(v: int, m: int) -> int:
    return (v + m - 1) // m * m


def _hgnn_kernel(x_ref, g_ref, w1_ref, b1_ref, w2_ref, b2_ref, *rest,
                 dropout_p: float):
    """One (padded) graph per grid step. Shapes seen by the kernel:
       x [Np,Fp], G [Np,Np], W1 [Fp,Hp], b1 [1,Hp], W2 [Hp,Cp], b2 [1,Cp],
       (bits [Np,Hp] uint32 if dropout), out [Np,Cp]."""
    if dropout_p > 0.0:
        bits_ref, o_ref = rest
    else:
        (o_ref,) = rest

    cd = jnp.bfloat16  # MXU operand dtype; accumulation stays f32.

    g_f32 = g_ref[...]
    g = g_f32.astype(cd)

    # ---- layer 1: (G @ x) @ W1 + rowsum(G) * b1, then ReLU -------------------
    # Exact reassociation of G @ (x @ W1 + b1); contraction width F < H.
    gx = jnp.dot(g, x_ref[...].astype(cd), preferred_element_type=jnp.float32)
    h = jnp.dot(gx.astype(cd), w1_ref[...].astype(cd),
                preferred_element_type=jnp.float32)
    g_rowsum = jnp.sum(g_f32, axis=-1, keepdims=True)          # XLU reduce
    h = h + g_rowsum * b1_ref[...]
    h = jnp.maximum(h, 0.0)

    # ---- dropout (inverted, training semantics of F.dropout) ----------------
    if dropout_p > 0.0:
        keep_thresh = jnp.uint32(min(int((1.0 - dropout_p) * (2 ** 32)),
                                     2 ** 32 - 1))
        keep = bits_ref[...] < keep_thresh                     # P(keep) = 1-p
        h = jnp.where(keep, h * (1.0 / (1.0 - dropout_p)), 0.0)

    # ---- layer 2: G @ (h @ W2 + b2)  (C <= H, so this association is cheap) --
    hw = jnp.dot(h.astype(cd), w2_ref[...].astype(cd),
                 preferred_element_type=jnp.float32) + b2_ref[...]
    o_ref[...] = jnp.dot(g, hw.astype(cd), preferred_element_type=jnp.float32)


def hgnn_forward(x, G, w1, b1, w2, b2, *, dropout_p: float = 0.0,
                 training: bool = False, rng_key=None, pad_to: int = 128):
    """Fused HGNN_pyg forward.

    x: [N, F] (single graph, module semantics) or [B, N, F] (batched graphs
    sharing G -- batching amortizes kernel-launch overhead via the grid).
    Pass training=True to apply dropout (F.dropout's default); rng_key must
    then be provided and should vary per training step.
    """
    single = (x.ndim == 2)
    if single:
        x = x[None]
    B, N, F = x.shape
    H = w1.shape[1]
    C = w2.shape[1]
    assert G.shape == (N, N)

    Np = _round_up(N, pad_to)
    Fp = _round_up(F, pad_to)
    Hp = _round_up(H, pad_to)
    Cp = _round_up(C, pad_to)

    # Zero-padding is inert for this network (checked: padded rows/cols of G,
    # x, W, b contribute nothing to the first N x C block of the output).
    xp = jnp.zeros((B, Np, Fp), jnp.float32).at[:, :N, :F].set(x)
    gp = jnp.zeros((Np, Np), jnp.float32).at[:N, :N].set(G)
    w1p = jnp.zeros((Fp, Hp), jnp.float32).at[:F, :H].set(w1)
    b1p = jnp.zeros((1, Hp), jnp.float32).at[0, :H].set(b1)
    w2p = jnp.zeros((Hp, Cp), jnp.float32).at[:H, :C].set(w2)
    b2p = jnp.zeros((1, Cp), jnp.float32).at[0, :C].set(b2)

    apply_dropout = training and dropout_p > 0.0
    kernel = functools.partial(
        _hgnn_kernel, dropout_p=dropout_p if apply_dropout else 0.0)

    args = [xp, gp, w1p, b1p, w2p, b2p]
    in_specs = [
        pl.BlockSpec((None, Np, Fp), lambda b: (b, 0, 0)),   # x   (per graph)
        pl.BlockSpec((Np, Np), lambda b: (0, 0)),            # G   (shared)
        pl.BlockSpec((Fp, Hp), lambda b: (0, 0)),            # W1
        pl.BlockSpec((1, Hp), lambda b: (0, 0)),             # b1
        pl.BlockSpec((Hp, Cp), lambda b: (0, 0)),            # W2
        pl.BlockSpec((1, Cp), lambda b: (0, 0)),             # b2
    ]
    if apply_dropout:
        if rng_key is None:
            raise ValueError("rng_key is required when training with dropout")
        # One independent uint32 stream per batched graph; caller folds the
        # training step into rng_key so masks differ across steps.
        bits = jax.random.bits(rng_key, (B, Np, Hp), dtype=jnp.uint32)
        args.append(bits)
        in_specs.append(pl.BlockSpec((None, Np, Hp), lambda b: (b, 0, 0)))

    out = pl.pallas_call(
        kernel,
        grid=(B,),
        in_specs=in_specs,
        out_specs=pl.BlockSpec((None, Np, Cp), lambda b: (b, 0, 0)),
        out_shape=jax.ShapeDtypeStruct((B, Np, Cp), jnp.float32),
        compiler_params=pltpu.CompilerParams(
            dimension_semantics=("parallel",)),
    )(*args)

    out = out[:, :N, :C]
    return out[0] if single else out


def hgnn_reference(x, G, w1, b1, w2, b2):
    """Pure-jnp eval-mode reference (dropout off)."""
    h = jax.nn.relu(G @ (x @ w1 + b1))
    return G @ (h @ w2 + b2)


def init_params(key, num_features, nhid, num_classes):
    """HGNN_conv init: uniform(-stdv, stdv), stdv = 1/sqrt(out_ft)."""
    k1, k2, k3, k4 = jax.random.split(key, 4)
    s1 = 1.0 / np.sqrt(nhid)
    s2 = 1.0 / np.sqrt(num_classes)
    w1 = jax.random.uniform(k1, (num_features, nhid), jnp.float32, -s1, s1)
    b1 = jax.random.uniform(k2, (nhid,), jnp.float32, -s1, s1)
    w2 = jax.random.uniform(k3, (nhid, num_classes), jnp.float32, -s2, s2)
    b2 = jax.random.uniform(k4, (num_classes,), jnp.float32, -s2, s2)
    return w1, b1, w2, b2


if __name__ == "__main__":
    # Small, deterministic problem: N nodes, dense hypergraph Laplacian G.
    N, NUM_FEATURES, NHID, NUM_CLASSES = 64, 16, 32, 8
    DROPOUT = 0.5

    key = jax.random.PRNGKey(0)
    kx, kg, kp, kd = jax.random.split(key, 4)

    x = jax.random.normal(kx, (N, NUM_FEATURES), jnp.float32)       # data.x
    G = jax.random.normal(kg, (N, N), jnp.float32) / jnp.sqrt(N)    # data.edge_index (dense G)
    w1, b1, w2, b2 = init_params(kp, NUM_FEATURES, NHID, NUM_CLASSES)

    # Eval-mode run (dropout off) -- compare against pure-jnp reference.
    out_eval = hgnn_forward(x, G, w1, b1, w2, b2,
                            dropout_p=DROPOUT, training=False)
    jax.block_until_ready(out_eval)
    ref = hgnn_reference(x, G, w1, b1, w2, b2)
    np.testing.assert_allclose(np.asarray(out_eval), np.asarray(ref),
                               rtol=1e-1, atol=1e-1)  # bf16 MXU operands

    # Training-mode run (dropout on) -- matches HGNN_pyg.forward semantics
    # (F.dropout default training=True).
    # TODO(synk): dropout RNG cannot bit-match torch's stream; Bernoulli(1-p)
    # keep mask + 1/(1-p) scaling semantics are reproduced.
    out_train = hgnn_forward(x, G, w1, b1, w2, b2,
                             dropout_p=DROPOUT, training=True, rng_key=kd)
    jax.block_until_ready(out_train)
    assert out_train.shape == (N, NUM_CLASSES)
    assert out_train.dtype == jnp.float32

    # Batched call: grid over graphs amortizes launch overhead and feeds both
    # TensorCores on v7x via the "parallel" grid axis.
    xb = jnp.stack([x, x + 1.0])
    out_b = hgnn_forward(xb, G, w1, b1, w2, b2,
                         dropout_p=DROPOUT, training=True, rng_key=kd)
    jax.block_until_ready(out_b)
    assert out_b.shape == (2, N, NUM_CLASSES)

    print("KERNEL_OK")
</pallas_src>

<mosaic_0001>
module attributes {stable_mosaic.version = 11 : i64} {
  func.func @_hgnn_kernel(%arg0: i32, %arg1: memref<1x128x128xf32, #tpu.memory_space<vmem>>, %arg2: memref<128x128xf32, #tpu.memory_space<vmem>>, %arg3: memref<128x128xf32, #tpu.memory_space<vmem>>, %arg4: memref<1x128xf32, #tpu.memory_space<vmem>>, %arg5: memref<128x128xf32, #tpu.memory_space<vmem>>, %arg6: memref<1x128xf32, #tpu.memory_space<vmem>>, %arg7: memref<1x128x128xf32, #tpu.memory_space<vmem>>) attributes {dimension_semantics = [#tpu.dimension_semantics<parallel>], iteration_bounds = array<i64: 1>, scalar_prefetch = 0 : i64, scratch_operands = 0 : i64, tpu.core_type = #tpu.core_type<tc>, window_params = [{transform_indices = @transform_0, window_bounds = array<i64: 1, 128, 128>}, {pipeline_mode = #tpu.pipeline_mode<synchronous>, transform_indices = @transform_1, window_bounds = array<i64: 128, 128>}, {pipeline_mode = #tpu.pipeline_mode<synchronous>, transform_indices = @transform_2, window_bounds = array<i64: 128, 128>}, {pipeline_mode = #tpu.pipeline_mode<synchronous>, transform_indices = @transform_3, window_bounds = array<i64: 1, 128>}, {pipeline_mode = #tpu.pipeline_mode<synchronous>, transform_indices = @transform_4, window_bounds = array<i64: 128, 128>}, {pipeline_mode = #tpu.pipeline_mode<synchronous>, transform_indices = @transform_5, window_bounds = array<i64: 1, 128>}, {transform_indices = @transform_6, window_bounds = array<i64: 1, 128, 128>}]} {
    %c0 = arith.constant 0 : index
    %c0_0 = arith.constant 0 : index
    %0 = vector.load %arg2[%c0, %c0_0] : memref<128x128xf32, #tpu.memory_space<vmem>>, vector<128x128xf32>
    %1 = arith.truncf %0 : vector<128x128xf32> to vector<128x128xbf16>
    %c0_1 = arith.constant 0 : index
    %c0_2 = arith.constant 0 : index
    %c0_3 = arith.constant 0 : index
    %2 = vector.load %arg1[%c0_1, %c0_2, %c0_3] : memref<1x128x128xf32, #tpu.memory_space<vmem>>, vector<1x128x128xf32>
    %3 = vector.shape_cast %2 : vector<1x128x128xf32> to vector<128x128xf32>
    %4 = arith.truncf %3 : vector<128x128xf32> to vector<128x128xbf16>
    %cst = arith.constant dense<0.000000e+00> : vector<128x128xf32>
    %5 = tpu.matmul %1, %4, %cst {dimension_numbers = #tpu.dot_dimension_numbers<[1], [0], [0], [1], [0, 0, 1, 1], [], []>} : vector<128x128xbf16>, vector<128x128xbf16>, vector<128x128xf32> -> vector<128x128xf32>
    %6 = arith.truncf %5 : vector<128x128xf32> to vector<128x128xbf16>
    %c0_4 = arith.constant 0 : index
    %c0_5 = arith.constant 0 : index
    %7 = vector.load %arg3[%c0_4, %c0_5] : memref<128x128xf32, #tpu.memory_space<vmem>>, vector<128x128xf32>
    %8 = arith.truncf %7 : vector<128x128xf32> to vector<128x128xbf16>
    %cst_6 = arith.constant dense<0.000000e+00> : vector<128x128xf32>
    %9 = tpu.matmul %6, %8, %cst_6 {dimension_numbers = #tpu.dot_dimension_numbers<[1], [0], [0], [1], [0, 0, 1, 1], [], []>} : vector<128x128xbf16>, vector<128x128xbf16>, vector<128x128xf32> -> vector<128x128xf32>
    %cst_7 = arith.constant dense<0.000000e+00> : vector<128xf32>
    %10 = vector.multi_reduction <add>, %0, %cst_7 [1] : vector<128x128xf32> to vector<128xf32>
    %11 = vector.shape_cast %10 : vector<128xf32> to vector<128x1xf32>
    %c0_8 = arith.constant 0 : index
    %c0_9 = arith.constant 0 : index
    %12 = vector.load %arg4[%c0_8, %c0_9] : memref<1x128xf32, #tpu.memory_space<vmem>>, vector<1x128xf32>
    %13 = vector.broadcast %11 : vector<128x1xf32> to vector<128x128xf32>
    %14 = vector.broadcast %12 : vector<1x128xf32> to vector<128x128xf32>
    %15 = arith.mulf %13, %14 : vector<128x128xf32>
    %16 = arith.addf %9, %15 : vector<128x128xf32>
    %cst_10 = arith.constant 0.000000e+00 : f32
    %17 = vector.broadcast %cst_10 : f32 to vector<128x128xf32>
    %18 = arith.maximumf %16, %17 : vector<128x128xf32>
    %19 = arith.truncf %18 : vector<128x128xf32> to vector<128x128xbf16>
    %c0_11 = arith.constant 0 : index
    %c0_12 = arith.constant 0 : index
    %20 = vector.load %arg5[%c0_11, %c0_12] : memref<128x128xf32, #tpu.memory_space<vmem>>, vector<128x128xf32>
    %21 = arith.truncf %20 : vector<128x128xf32> to vector<128x128xbf16>
    %cst_13 = arith.constant dense<0.000000e+00> : vector<128x128xf32>
    %22 = tpu.matmul %19, %21, %cst_13 {dimension_numbers = #tpu.dot_dimension_numbers<[1], [0], [0], [1], [0, 0, 1, 1], [], []>} : vector<128x128xbf16>, vector<128x128xbf16>, vector<128x128xf32> -> vector<128x128xf32>
    %c0_14 = arith.constant 0 : index
    %c0_15 = arith.constant 0 : index
    %23 = vector.load %arg6[%c0_14, %c0_15] : memref<1x128xf32, #tpu.memory_space<vmem>>, vector<1x128xf32>
    %24 = vector.broadcast %23 : vector<1x128xf32> to vector<128x128xf32>
    %25 = arith.addf %22, %24 : vector<128x128xf32>
    %26 = arith.truncf %25 : vector<128x128xf32> to vector<128x128xbf16>
    %cst_16 = arith.constant dense<0.000000e+00> : vector<128x128xf32>
    %27 = tpu.matmul %1, %26, %cst_16 {dimension_numbers = #tpu.dot_dimension_numbers<[1], [0], [0], [1], [0, 0, 1, 1], [], []>} : vector<128x128xbf16>, vector<128x128xbf16>, vector<128x128xf32> -> vector<128x128xf32>
    %c0_17 = arith.constant 0 : index
    %c0_18 = arith.constant 0 : index
    %c0_19 = arith.constant 0 : index
    %28 = vector.load %arg7[%c0_17, %c0_18, %c0_19] : memref<1x128x128xf32, #tpu.memory_space<vmem>>, vector<1x128x128xf32>
    %29 = vector.shape_cast %28 : vector<1x128x128xf32> to vector<128x128xf32>
    %30 = vector.shape_cast %27 : vector<128x128xf32> to vector<1x128x128xf32>
    tpu.vector_store %arg7[%c0_17, %c0_18, %c0_19], %30 {strides = array<i32>} : memref<1x128x128xf32, #tpu.memory_space<vmem>>, vector<1x128x128xf32>,
    return
  }
  func.func @transform_0(%arg0: i32) -> (i32, i32, i32) {
    %c0_i32 = arith.constant 0 : i32
    %c0_i32_0 = arith.constant 0 : i32
    %c0_i32_1 = arith.constant 0 : i32
    return %arg0, %c0_i32, %c0_i32_0 : i32, i32, i32
  }
  func.func @transform_1(%arg0: i32) -> (i32, i32) {
    %c0_i32 = arith.constant 0 : i32
    %c0_i32_0 = arith.constant 0 : i32
    %c0_i32_1 = arith.constant 0 : i32
    return %c0_i32, %c0_i32_0 : i32, i32
  }
  func.func @transform_2(%arg0: i32) -> (i32, i32) {
    %c0_i32 = arith.constant 0 : i32
    %c0_i32_0 = arith.constant 0 : i32
    %c0_i32_1 = arith.constant 0 : i32
    return %c0_i32, %c0_i32_0 : i32, i32
  }
  func.func @transform_3(%arg0: i32) -> (i32, i32) {
    %c0_i32 = arith.constant 0 : i32
    %c0_i32_0 = arith.constant 0 : i32
    %c0_i32_1 = arith.constant 0 : i32
    return %c0_i32, %c0_i32_0 : i32, i32
  }
  func.func @transform_4(%arg0: i32) -> (i32, i32) {
    %c0_i32 = arith.constant 0 : i32
    %c0_i32_0 = arith.constant 0 : i32
    %c0_i32_1 = arith.constant 0 : i32
    return %c0_i32, %c0_i32_0 : i32, i32
  }
  func.func @transform_5(%arg0: i32) -> (i32, i32) {
    %c0_i32 = arith.constant 0 : i32
    %c0_i32_0 = arith.constant 0 : i32
    %c0_i32_1 = arith.constant 0 : i32
    return %c0_i32, %c0_i32_0 : i32, i32
  }
  func.func @transform_6(%arg0: i32) -> (i32, i32, i32) {
    %c0_i32 = arith.constant 0 : i32
    %c0_i32_0 = arith.constant 0 : i32
    %c0_i32_1 = arith.constant 0 : i32
    return %arg0, %c0_i32, %c0_i32_0 : i32, i32, i32
  }
}

</mosaic_0001>

<llo_original>
// kernel: tpu_custom_call.1
$region0: #{tpu_custom_call.1}
  #allocation0 [shape = 'u32[]', space=smem, size = 0x4, offset = 0x4, fixed_abs, tag = 'smem constant byte address 0x4 - core index']
  #allocation1 [shape = 'u32[144,128]{1,0:T(1,128)}', space=vmem, size = 0x12000, scoped, tag = 'internal scratch']
  %s0 = inlined_call_operand.hbm [shape: f32[1,128,128], index: 0, kind: input, shape index: {}]
  %s1 = inlined_call_operand.hbm [shape: f32[128,128], index: 1, kind: input, shape index: {}]
  %s2 = inlined_call_operand.hbm [shape: f32[128,128], index: 2, kind: input, shape index: {}]
  %s3 = inlined_call_operand.vmem [shape: f32[1,128], index: 3, kind: input, shape index: {}]
  %s4 = inlined_call_operand.hbm [shape: f32[128,128], index: 4, kind: input, shape index: {}]
  %s5 = inlined_call_operand.vmem [shape: f32[1,128], index: 5, kind: input, shape index: {}]
  %s6 = inlined_call_operand.hbm [shape: f32[1,128,128], index: 6, kind: output, shape index: {}]
  %s7 = sld [smem:[#allocation0]]
  $region50: #{tpu_custom_call.1} parent=0
    _
  %s9 = ssub.s32 1, %s7
  %s10 = scalar_select 0, %s9, %s7
  $region1: #{tpu_custom_call.1} parent=0
    #allocation2 [shape = 'u8[65536]{0}', space=vmem, size = 0x10000, scoped, tag = 'input window, operand 0, single buffered']
    #allocation3 [shape = 's32[1]{0}', space=sflag, size = 0x4, scoped, tag = 'scoped memory for tpu_custom_call.1']
    #allocation4 [shape = 's32[1]{0}', space=sflag, size = 0x4, scoped, tag = 'scoped memory for tpu_custom_call.1']
    #allocation5 [shape = 'u8[65536]{0}', space=vmem, size = 0x10000, scoped, tag = 'input window, operand 1, single buffered']
    #allocation6 [shape = 's32[1]{0}', space=sflag, size = 0x4, scoped, tag = 'scoped memory for tpu_custom_call.1']
    #allocation7 [shape = 'u8[65536]{0}', space=vmem, size = 0x10000, scoped, tag = 'input window, operand 2, single buffered']
    #allocation8 [shape = 'u8[65536]{0}', space=vmem, size = 0x10000, scoped, tag = 'input window, operand 4, single buffered']
    #allocation9 [shape = 's32[1]{0}', space=sflag, size = 0x4, scoped, tag = 'scoped memory for tpu_custom_call.1']
    #allocation10 [shape = 'u8[65536]{0}', space=vmem, size = 0x10000, scoped, tag = 'output window, operand 0, single buffered']
    %11 = vsyncpa [#allocation3], 0
    %12 = vsyncpa [#allocation6], 0
    %13 = vsyncpa [#allocation9], 0
    %14 = vsyncpa [#allocation4], 0
    // Predicated region
    $region2: #{tpu_custom_call.1} parent=1 // pred_check
      _
    $region3: #{tpu_custom_call.1} parent=1 // pred_check_branch
      %16 = sbr.rel (0) target = $region5
    $region4: #{tpu_custom_call.1} parent=1 // pred_region
      %s18 = ssub.s32 2048, 2048
      %19 = vsyncadd [#allocation3], %s18
      %s20 = sshll.u32 [#allocation2], 4
      %s21 = int_to_ptr.vmem [resolvable:$true] %s20
      %26 = dma.hbm_to_vmem [thread:$0]  %s0, 2048, %s21, [#allocation3], 128, 128, 8
    $region5: #{tpu_custom_call.1} parent=1 // pred_fallthru
      _
    // Predicated region
    $region6: #{tpu_custom_call.1} parent=1 // pred_check
      _
    $region7: #{tpu_custom_call.1} parent=1 // pred_check_branch
      %28 = sbr.rel (0) target = $region9
    $region8: #{tpu_custom_call.1} parent=1 // pred_region
      %s30 = ssub.s32 2048, 2048
      %31 = vsyncadd [#allocation6], %s30
      %s32 = sshll.u32 [#allocation5], 4
      %s33 = int_to_ptr.vmem [resolvable:$true] %s32
      %38 = dma.hbm_to_vmem [thread:$0]  %s1, 2048, %s33, [#allocation6], 128, 128, 8
    $region9: #{tpu_custom_call.1} parent=1 // pred_fallthru
      _
    // Predicated region
    $region10: #{tpu_custom_call.1} parent=1 // pred_check
      _
    $region11: #{tpu_custom_call.1} parent=1 // pred_check_branch
      %40 = sbr.rel (0) target = $region13
    $region12: #{tpu_custom_call.1} parent=1 // pred_region
      %s42 = ssub.s32 2048, 2048
      %43 = vsyncadd [#allocation6], %s42
      %s44 = sshll.u32 [#allocation7], 4
      %s45 = int_to_ptr.vmem [resolvable:$true] %s44
      %50 = dma.hbm_to_vmem [thread:$0]  %s2, 2048, %s45, [#allocation6], 128, 128, 8
    $region13: #{tpu_custom_call.1} parent=1 // pred_fallthru
      _
    // Predicated region
    $region14: #{tpu_custom_call.1} parent=1 // pred_check
      _
    $region15: #{tpu_custom_call.1} parent=1 // pred_check_branch
      %52 = sbr.rel (0) target = $region17
    $region16: #{tpu_custom_call.1} parent=1 // pred_region
      _
    $region17: #{tpu_custom_call.1} parent=1 // pred_fallthru
      _
    // Predicated region
    $region18: #{tpu_custom_call.1} parent=1 // pred_check
      _
    $region19: #{tpu_custom_call.1} parent=1 // pred_check_branch
      %54 = sbr.rel (0) target = $region21
    $region20: #{tpu_custom_call.1} parent=1 // pred_region
      %s56 = ssub.s32 2048, 2048
      %57 = vsyncadd [#allocation9], %s56
      %s58 = sshll.u32 [#allocation8], 4
      %s59 = int_to_ptr.vmem [resolvable:$true] %s58
      %64 = dma.hbm_to_vmem [thread:$0]  %s4, 2048, %s59, [#allocation9], 128, 128, 8
    $region21: #{tpu_custom_call.1} parent=1 // pred_fallthru
      _
    // Predicated region
    $region22: #{tpu_custom_call.1} parent=1 // pred_check
      _
    $region23: #{tpu_custom_call.1} parent=1 // pred_check_branch
      %66 = sbr.rel (0) target = $region25
    $region24: #{tpu_custom_call.1} parent=1 // pred_region
      _
    $region25: #{tpu_custom_call.1} parent=1 // pred_fallthru
      _
    // Predicated region
    $region26: #{tpu_custom_call.1} parent=1 // pred_check
      _
    $region27: #{tpu_custom_call.1} parent=1 // pred_check_branch
      %68 = sbr.rel (0) target = $region29
    $region28: #{tpu_custom_call.1} parent=1 // pred_region
      %69 = dma.done [#allocation3], 2048
    $region29: #{tpu_custom_call.1} parent=1 // pred_fallthru
      _
    // Predicated region
    $region30: #{tpu_custom_call.1} parent=1 // pred_check
      _
    $region31: #{tpu_custom_call.1} parent=1 // pred_check_branch
      %71 = sbr.rel (0) target = $region33
    $region32: #{tpu_custom_call.1} parent=1 // pred_region
      %72 = dma.done [#allocation6], 2048
    $region33: #{tpu_custom_call.1} parent=1 // pred_fallthru
      _
    // Predicated region
    $region34: #{tpu_custom_call.1} parent=1 // pred_check
      _
    $region35: #{tpu_custom_call.1} parent=1 // pred_check_branch
      %74 = sbr.rel (0) target = $region37
    $region36: #{tpu_custom_call.1} parent=1 // pred_region
      %75 = dma.done [#allocation6], 2048
    $region37: #{tpu_custom_call.1} parent=1 // pred_fallthru
      _
    // Predicated region
    $region38: #{tpu_custom_call.1} parent=1 // pred_check
      _
    $region39: #{tpu_custom_call.1} parent=1 // pred_check_branch
      %77 = sbr.rel (0) target = $region41
    $region40: #{tpu_custom_call.1} parent=1 // pred_region
      %78 = dma.done [#allocation9], 2048
    $region41: #{tpu_custom_call.1} parent=1 // pred_fallthru
      _
    %v80 = vld [vmem:[#allocation5] sm:$0xff]
    %v81 = vld [vmem:[#allocation5 + $0x8] sm:$0xff]
    %v82 = vld [vmem:[#allocation5 + $0x10] sm:$0xff]
    %v83 = vld [vmem:[#allocation5 + $0x18] sm:$0xff]
    %v84 = vld [vmem:[#allocation5 + $0x20] sm:$0xff]
    %v85 = vld [vmem:[#allocation5 + $0x28] sm:$0xff]
    %v86 = vld [vmem:[#allocation5 + $0x30] sm:$0xff]
    %v87 = vld [vmem:[#allocation5 + $0x38] sm:$0xff]
    %v88 = vld [vmem:[#allocation5 + $0x40] sm:$0xff]
    %v89 = vld [vmem:[#allocation5 + $0x48] sm:$0xff]
    %v90 = vld [vmem:[#allocation5 + $0x50] sm:$0xff]
    %v91 = vld [vmem:[#allocation5 + $0x58] sm:$0xff]
    %v92 = vld [vmem:[#allocation5 + $0x60] sm:$0xff]
    %v93 = vld [vmem:[#allocation5 + $0x68] sm:$0xff]
    %v94 = vld [vmem:[#allocation5 + $0x70] sm:$0xff]
    %v95 = vld [vmem:[#allocation5 + $0x78] sm:$0xff]
    %v96 = vpack.c.bf16 %v81, %v80
    %v97 = vpack.c.bf16 %v83, %v82
    %v98 = vpack.c.bf16 %v85, %v84
    %v99 = vpack.c.bf16 %v87, %v86
    %v100 = vpack.c.bf16 %v89, %v88
    %v101 = vpack.c.bf16 %v91, %v90
    %v102 = vpack.c.bf16 %v93, %v92
    %v103 = vpack.c.bf16 %v95, %v94
    %v104 = vld [vmem:[#allocation2] sm:$0xff]
    %v105 = vld [vmem:[#allocation2 + $0x8] sm:$0xff]
    %v106 = vld [vmem:[#allocation2 + $0x10] sm:$0xff]
    %v107 = vld [vmem:[#allocation2 + $0x18] sm:$0xff]
    %v108 = vld [vmem:[#allocation2 + $0x20] sm:$0xff]
    %v109 = vld [vmem:[#allocation2 + $0x28] sm:$0xff]
    %v110 = vld [vmem:[#allocation2 + $0x30] sm:$0xff]
    %v111 = vld [vmem:[#allocation2 + $0x38] sm:$0xff]
    %v112 = vld [vmem:[#allocation2 + $0x40] sm:$0xff]
    %v113 = vld [vmem:[#allocation2 + $0x48] sm:$0xff]
    %v114 = vld [vmem:[#allocation2 + $0x50] sm:$0xff]
    %v115 = vld [vmem:[#allocation2 + $0x58] sm:$0xff]
    %v116 = vld [vmem:[#allocation2 + $0x60] sm:$0xff]
    %v117 = vld [vmem:[#allocation2 + $0x68] sm:$0xff]
    %v118 = vld [vmem:[#allocation2 + $0x70] sm:$0xff]
    %v119 = vld [vmem:[#allocation2 + $0x78] sm:$0xff]
    %v120 = vpack.c.bf16 %v105, %v104
    %v121 = vpack.c.bf16 %v107, %v106
    %v122 = vpack.c.bf16 %v109, %v108
    %v123 = vpack.c.bf16 %v111, %v110
    %v124 = vpack.c.bf16 %v113, %v112
    %v125 = vpack.c.bf16 %v115, %v114
    %v126 = vpack.c.bf16 %v117, %v116
    %v127 = vpack.c.bf16 %v119, %v118
    %128 = vmatprep.subr.bf16.mxu0 0
    %129 = vmatpush1.bf16.msra.mxu0 %v120
    %130 = vmatprep.subr.bf16.mxu0 0
    %131 = vmatpush1.bf16.msra.mxu0 %v121
    %132 = vmatprep.subr.bf16.mxu0 0
    %133 = vmatpush1.bf16.msra.mxu0 %v122
    %134 = vmatprep.subr.bf16.mxu0 0
    %135 = vmatpush1.bf16.msra.mxu0 %v123
    %136 = vmatprep.subr.bf16.mxu0 0
    %137 = vmatpush1.bf16.msra.mxu0 %v124
    %138 = vmatprep.subr.bf16.mxu0 0
    %139 = vmatpush1.bf16.msra.mxu0 %v125
    %140 = vmatprep.subr.bf16.mxu0 0
    %141 = vmatpush1.bf16.msra.mxu0 %v126
    %142 = vmatprep.subr.bf16.mxu0 0
    %143 = vmatpush1.bf16.msra.mxu0 %v127
    %144 = vmatprep.subr.bf16.mxu0 0
    %145 = vmatpush1.bf16.msra.mxu0 0
    %146 = vmatprep.subr.bf16.mxu0 0
    %147 = vmatpush1.bf16.msra.mxu0 0
    %148 = vmatprep.subr.bf16.mxu0 0
    %149 = vmatpush1.bf16.msra.mxu0 0
    %150 = vmatprep.subr.bf16.mxu0 0
    %151 = vmatpush1.bf16.msra.mxu0 0
    %152 = vmatprep.subr.bf16.mxu0 0
    %153 = vmatpush1.bf16.msra.mxu0 0
    %154 = vmatprep.subr.bf16.mxu0 0
    %155 = vmatpush1.bf16.msra.mxu0 0
    %156 = vmatprep.subr.bf16.mxu0 0
    %157 = vmatpush1.bf16.msra.mxu0 0
    %158 = vmatprep.subr.bf16.mxu0 0
    %159 = vmatpush1.bf16.msra.mxu0 0
    %160 = vmatprep.mubr.bf16.mxu0 0
    %161 = vmatmul.mubr.bf16.gmra.mrb[0].mxu0 %v96
    %v162 = vpop.f32.mrb[0].mxu0
    %v163 = vadd.f32 0.0, %v162
    %v164 = vpop.f32.mrb[0].mxu0
    %v165 = vpop.f32.mrb[0].mxu0
    %v166 = vadd.f32 0.0, %v165
    %v167 = vpop.f32.mrb[0].mxu0
    %168 = vmatprep.mubr.bf16.mxu0 0
    %169 = vmatmul.mubr.bf16.gmra.mrb[0].mxu0 %v97
    %v170 = vpop.f32.mrb[0].mxu0
    %v171 = vadd.f32 0.0, %v170
    %v172 = vpop.f32.mrb[0].mxu0
    %v173 = vpop.f32.mrb[0].mxu0
    %v174 = vadd.f32 0.0, %v173
    %v175 = vpop.f32.mrb[0].mxu0
    %176 = vmatprep.mubr.bf16.mxu0 0
    %177 = vmatmul.mubr.bf16.gmra.mrb[0].mxu0 %v98
    %v178 = vpop.f32.mrb[0].mxu0
    %v179 = vadd.f32 0.0, %v178
    %v180 = vpop.f32.mrb[0].mxu0
    %v181 = vpop.f32.mrb[0].mxu0
    %v182 = vadd.f32 0.0, %v181
    %v183 = vpop.f32.mrb[0].mxu0
    %184 = vmatprep.mubr.bf16.mxu0 0
    %185 = vmatmul.mubr.bf16.gmra.mrb[0].mxu0 %v99
    %v186 = vpop.f32.mrb[0].mxu0
    %v187 = vadd.f32 0.0, %v186
    %v188 = vpop.f32.mrb[0].mxu0
    %v189 = vpop.f32.mrb[0].mxu0
    %v190 = vadd.f32 0.0, %v189
    %v191 = vpop.f32.mrb[0].mxu0
    %192 = vmatprep.mubr.bf16.mxu0 0
    %193 = vmatmul.mubr.bf16.gmra.mrb[0].mxu0 %v100
    %v194 = vpop.f32.mrb[0].mxu0
    %v195 = vadd.f32 0.0, %v194
    %v196 = vpop.f32.mrb[0].mxu0
    %v197 = vpop.f32.mrb[0].mxu0
    %v198 = vadd.f32 0.0, %v197
    %v199 = vpop.f32.mrb[0].mxu0
    %200 = vmatprep.mubr.bf16.mxu0 0
    %201 = vmatmul.mubr.bf16.gmra.mrb[0].mxu0 %v101
    %v202 = vpop.f32.mrb[0].mxu0
    %v203 = vadd.f32 0.0, %v202
    %v204 = vpop.f32.mrb[0].mxu0
    %v205 = vpop.f32.mrb[0].mxu0
    %v206 = vadd.f32 0.0, %v205
    %v207 = vpop.f32.mrb[0].mxu0
    %208 = vmatprep.mubr.bf16.mxu0 0
    %209 = vmatmul.mubr.bf16.gmra.mrb[0].mxu0 %v102
    %v210 = vpop.f32.mrb[0].mxu0
    %v211 = vadd.f32 0.0, %v210
    %v212 = vpop.f32.mrb[0].mxu0
    %v213 = vpop.f32.mrb[0].mxu0
    %v214 = vadd.f32 0.0, %v213
    %v215 = vpop.f32.mrb[0].mxu0
    %216 = vmatprep.mubr.bf16.mxu0 0
    %217 = vmatmul.mubr.bf16.gmra.mrb[0].mxu0 %v103
    %v218 = vpop.f32.mrb[0].mxu0
    %v219 = vadd.f32 0.0, %v218
    %v220 = vpop.f32.mrb[0].mxu0
    %v221 = vpop.f32.mrb[0].mxu0
    %v222 = vadd.f32 0.0, %v221
    %v223 = vpop.f32.mrb[0].mxu0
    %224 = vdwg.mxu0
    %v225 = vpack.c.bf16 %v166, %v163
    %v226 = vpack.c.bf16 %v174, %v171
    %v227 = vpack.c.bf16 %v182, %v179
    %v228 = vpack.c.bf16 %v190, %v187
    %v229 = vpack.c.bf16 %v198, %v195
    %v230 = vpack.c.bf16 %v206, %v203
    %v231 = vpack.c.bf16 %v214, %v211
    %v232 = vpack.c.bf16 %v222, %v219
    %v233 = vld [vmem:[#allocation7] sm:$0xff]
    %v234 = vld [vmem:[#allocation7 + $0x8] sm:$0xff]
    %v235 = vld [vmem:[#allocation7 + $0x10] sm:$0xff]
    %v236 = vld [vmem:[#allocation7 + $0x18] sm:$0xff]
    %v237 = vld [vmem:[#allocation7 + $0x20] sm:$0xff]
    %v238 = vld [vmem:[#allocation7 + $0x28] sm:$0xff]
    %v239 = vld [vmem:[#allocation7 + $0x30] sm:$0xff]
    %v240 = vld [vmem:[#allocation7 + $0x38] sm:$0xff]
    %v241 = vld [vmem:[#allocation7 + $0x40] sm:$0xff]
    %v242 = vld [vmem:[#allocation7 + $0x48] sm:$0xff]
    %v243 = vld [vmem:[#allocation7 + $0x50] sm:$0xff]
    %v244 = vld [vmem:[#allocation7 + $0x58] sm:$0xff]
    %v245 = vld [vmem:[#allocation7 + $0x60] sm:$0xff]
    %v246 = vld [vmem:[#allocation7 + $0x68] sm:$0xff]
    %v247 = vld [vmem:[#allocation7 + $0x70] sm:$0xff]
    %v248 = vld [vmem:[#allocation7 + $0x78] sm:$0xff]
    %v249 = vpack.c.bf16 %v234, %v233
    %v250 = vpack.c.bf16 %v236, %v235
    %v251 = vpack.c.bf16 %v238, %v237
    %v252 = vpack.c.bf16 %v240, %v239
    %v253 = vpack.c.bf16 %v242, %v241
    %v254 = vpack.c.bf16 %v244, %v243
    %v255 = vpack.c.bf16 %v246, %v245
    %v256 = vpack.c.bf16 %v248, %v247
    %257 = vadd.xlane.f32.xlu0 %v80
    %v258 = vpop.xlane.xlu0 %257
    %259 = vadd.xlane.f32.xlu0 %v81
    %v260 = vpop.xlane.xlu0 %259
    %261 = vadd.xlane.f32.xlu0 %v82
    %v262 = vpop.xlane.xlu0 %261
    %263 = vadd.xlane.f32.xlu0 %v83
    %v264 = vpop.xlane.xlu0 %263
    %265 = vadd.xlane.f32.xlu0 %v84
    %v266 = vpop.xlane.xlu0 %265
    %267 = vadd.xlane.f32.xlu0 %v85
    %v268 = vpop.xlane.xlu0 %267
    %269 = vadd.xlane.f32.xlu0 %v86
    %v270 = vpop.xlane.xlu0 %269
    %271 = vadd.xlane.f32.xlu0 %v87
    %v272 = vpop.xlane.xlu0 %271
    %273 = vadd.xlane.f32.xlu0 %v88
    %v274 = vpop.xlane.xlu0 %273
    %275 = vadd.xlane.f32.xlu0 %v89
    %v276 = vpop.xlane.xlu0 %275
    %277 = vadd.xlane.f32.xlu0 %v90
    %v278 = vpop.xlane.xlu0 %277
    %279 = vadd.xlane.f32.xlu0 %v91
    %v280 = vpop.xlane.xlu0 %279
    %281 = vadd.xlane.f32.xlu0 %v92
    %v282 = vpop.xlane.xlu0 %281
    %283 = vadd.xlane.f32.xlu0 %v93
    %v284 = vpop.xlane.xlu0 %283
    %285 = vadd.xlane.f32.xlu0 %v94
    %v286 = vpop.xlane.xlu0 %285
    %287 = vadd.xlane.f32.xlu0 %v95
    %v288 = vpop.xlane.xlu0 %287
    %v289 = vld [vmem:[%s3] sm:$0x1]
    %v291 = vlaneseq
    %v292 = vshrl.u32 %v291, 7
    %v293 = vsub.s32 0, %v292
    %v294 = vrot.slane %v289, %v293
    %v296 = vmul.f32 %v258, %v294
    %v297 = vmul.f32 %v260, %v294
    %v298 = vmul.f32 %v262, %v294
    %v299 = vmul.f32 %v264, %v294
    %v300 = vmul.f32 %v266, %v294
    %v301 = vmul.f32 %v268, %v294
    %v302 = vmul.f32 %v270, %v294
    %v303 = vmul.f32 %v272, %v294
    %v304 = vmul.f32 %v274, %v294
    %v305 = vmul.f32 %v276, %v294
    %v306 = vmul.f32 %v278, %v294
    %v307 = vmul.f32 %v280, %v294
    %v308 = vmul.f32 %v282, %v294
    %v309 = vmul.f32 %v284, %v294
    %v310 = vmul.f32 %v286, %v294
    %v311 = vmul.f32 %v288, %v294
    %312 = vmatprep.subr.bf16.mxu0 0
    %313 = vmatpush1.bf16.msra.mxu0 %v249
    %314 = vmatprep.subr.bf16.mxu0 0
    %315 = vmatpush1.bf16.msra.mxu0 %v250
    %316 = vmatprep.subr.bf16.mxu0 0
    %317 = vmatpush1.bf16.msra.mxu0 %v251
    %318 = vmatprep.subr.bf16.mxu0 0
    %319 = vmatpush1.bf16.msra.mxu0 %v252
    %320 = vmatprep.subr.bf16.mxu0 0
    %321 = vmatpush1.bf16.msra.mxu0 %v253
    %322 = vmatprep.subr.bf16.mxu0 0
    %323 = vmatpush1.bf16.msra.mxu0 %v254
    %324 = vmatprep.subr.bf16.mxu0 0
    %325 = vmatpush1.bf16.msra.mxu0 %v255
    %326 = vmatprep.subr.bf16.mxu0 0
    %327 = vmatpush1.bf16.msra.mxu0 %v256
    %328 = vmatprep.subr.bf16.mxu0 0
    %329 = vmatpush1.bf16.msra.mxu0 0
    %330 = vmatprep.subr.bf16.mxu0 0
    %331 = vmatpush1.bf16.msra.mxu0 0
    %332 = vmatprep.subr.bf16.mxu0 0
    %333 = vmatpush1.bf16.msra.mxu0 0
    %334 = vmatprep.subr.bf16.mxu0 0
    %335 = vmatpush1.bf16.msra.mxu0 0
    %336 = vmatprep.subr.bf16.mxu0 0
    %337 = vmatpush1.bf16.msra.mxu0 0
    %338 = vmatprep.subr.bf16.mxu0 0
    %339 = vmatpush1.bf16.msra.mxu0 0
    %340 = vmatprep.subr.bf16.mxu0 0
    %341 = vmatpush1.bf16.msra.mxu0 0
    %342 = vmatprep.subr.bf16.mxu0 0
    %343 = vmatpush1.bf16.msra.mxu0 0
    %344 = vmatprep.mubr.bf16.mxu0 0
    %345 = vmatmul.mubr.bf16.gmra.mrb[0].mxu0 %v225
    %v346 = vpop.f32.mrb[0].mxu0
    %v347 = vadd.f32 %v296, %v346
    %v348 = vpop.f32.mrb[0].mxu0
    %v349 = vpop.f32.mrb[0].mxu0
    %v350 = vadd.f32 %v297, %v349
    %v351 = vpop.f32.mrb[0].mxu0
    %352 = vmatprep.mubr.bf16.mxu0 0
    %353 = vmatmul.mubr.bf16.gmra.mrb[0].mxu0 %v226
    %v354 = vpop.f32.mrb[0].mxu0
    %v355 = vadd.f32 %v298, %v354
    %v356 = vpop.f32.mrb[0].mxu0
    %v357 = vpop.f32.mrb[0].mxu0
    %v358 = vadd.f32 %v299, %v357
    %v359 = vpop.f32.mrb[0].mxu0
    %360 = vmatprep.mubr.bf16.mxu0 0
    %361 = vmatmul.mubr.bf16.gmra.mrb[0].mxu0 %v227
    %v362 = vpop.f32.mrb[0].mxu0
    %v363 = vadd.f32 %v300, %v362
    %v364 = vpop.f32.mrb[0].mxu0
    %v365 = vpop.f32.mrb[0].mxu0
    %v366 = vadd.f32 %v301, %v365
    %v367 = vpop.f32.mrb[0].mxu0
    %368 = vmatprep.mubr.bf16.mxu0 0
    %369 = vmatmul.mubr.bf16.gmra.mrb[0].mxu0 %v228
    %v370 = vpop.f32.mrb[0].mxu0
    %v371 = vadd.f32 %v302, %v370
    %v372 = vpop.f32.mrb[0].mxu0
    %v373 = vpop.f32.mrb[0].mxu0
    %v374 = vadd.f32 %v303, %v373
    %v375 = vpop.f32.mrb[0].mxu0
    %376 = vmatprep.mubr.bf16.mxu0 0
    %377 = vmatmul.mubr.bf16.gmra.mrb[0].mxu0 %v229
    %v378 = vpop.f32.mrb[0].mxu0
    %v379 = vadd.f32 %v304, %v378
    %v380 = vpop.f32.mrb[0].mxu0
    %v381 = vpop.f32.mrb[0].mxu0
    %v382 = vadd.f32 %v305, %v381
    %v383 = vpop.f32.mrb[0].mxu0
    %384 = vmatprep.mubr.bf16.mxu0 0
    %385 = vmatmul.mubr.bf16.gmra.mrb[0].mxu0 %v230
    %v386 = vpop.f32.mrb[0].mxu0
    %v387 = vadd.f32 %v306, %v386
    %v388 = vpop.f32.mrb[0].mxu0
    %v389 = vpop.f32.mrb[0].mxu0
    %v390 = vadd.f32 %v307, %v389
    %v391 = vpop.f32.mrb[0].mxu0
    %392 = vmatprep.mubr.bf16.mxu0 0
    %393 = vmatmul.mubr.bf16.gmra.mrb[0].mxu0 %v231
    %v394 = vpop.f32.mrb[0].mxu0
    %v395 = vadd.f32 %v308, %v394
    %v396 = vpop.f32.mrb[0].mxu0
    %v397 = vpop.f32.mrb[0].mxu0
    %v398 = vadd.f32 %v309, %v397
    %v399 = vpop.f32.mrb[0].mxu0
    %400 = vmatprep.mubr.bf16.mxu0 0
    %401 = vmatmul.mubr.bf16.gmra.mrb[0].mxu0 %v232
    %v402 = vpop.f32.mrb[0].mxu0
    %v403 = vadd.f32 %v310, %v402
    %v404 = vpop.f32.mrb[0].mxu0
    %v405 = vpop.f32.mrb[0].mxu0
    %v406 = vadd.f32 %v311, %v405
    %v407 = vpop.f32.mrb[0].mxu0
    %408 = vdwg.mxu0
    %v409 = vmax.f32 %v347, 0.0
    %v410 = vmax.f32 %v350, 0.0
    %v411 = vmax.f32 %v355, 0.0
    %v412 = vmax.f32 %v358, 0.0
    %v413 = vmax.f32 %v363, 0.0
    %v414 = vmax.f32 %v366, 0.0
    %v415 = vmax.f32 %v371, 0.0
    %v416 = vmax.f32 %v374, 0.0
    %v417 = vmax.f32 %v379, 0.0
    %v418 = vmax.f32 %v382, 0.0
    %v419 = vmax.f32 %v387, 0.0
    %v420 = vmax.f32 %v390, 0.0
    %v421 = vmax.f32 %v395, 0.0
    %v422 = vmax.f32 %v398, 0.0
    %v423 = vmax.f32 %v403, 0.0
    %v424 = vmax.f32 %v406, 0.0
    %v425 = vpack.c.bf16 %v410, %v409
    %v426 = vpack.c.bf16 %v412, %v411
    %v427 = vpack.c.bf16 %v414, %v413
    %v428 = vpack.c.bf16 %v416, %v415
    %v429 = vpack.c.bf16 %v418, %v417
    %v430 = vpack.c.bf16 %v420, %v419
    %v431 = vpack.c.bf16 %v422, %v421
    %v432 = vpack.c.bf16 %v424, %v423
    %v433 = vld [vmem:[#allocation8] sm:$0xff]
    %v434 = vld [vmem:[#allocation8 + $0x8] sm:$0xff]
    %v435 = vld [vmem:[#allocation8 + $0x10] sm:$0xff]
    %v436 = vld [vmem:[#allocation8 + $0x18] sm:$0xff]
    %v437 = vld [vmem:[#allocation8 + $0x20] sm:$0xff]
    %v438 = vld [vmem:[#allocation8 + $0x28] sm:$0xff]
    %v439 = vld [vmem:[#allocation8 + $0x30] sm:$0xff]
    %v440 = vld [vmem:[#allocation8 + $0x38] sm:$0xff]
    %v441 = vld [vmem:[#allocation8 + $0x40] sm:$0xff]
    %v442 = vld [vmem:[#allocation8 + $0x48] sm:$0xff]
    %v443 = vld [vmem:[#allocation8 + $0x50] sm:$0xff]
    %v444 = vld [vmem:[#allocation8 + $0x58] sm:$0xff]
    %v445 = vld [vmem:[#allocation8 + $0x60] sm:$0xff]
    %v446 = vld [vmem:[#allocation8 + $0x68] sm:$0xff]
    %v447 = vld [vmem:[#allocation8 + $0x70] sm:$0xff]
    %v448 = vld [vmem:[#allocation8 + $0x78] sm:$0xff]
    %v449 = vpack.c.bf16 %v434, %v433
    %v450 = vpack.c.bf16 %v436, %v435
    %v451 = vpack.c.bf16 %v438, %v437
    %v452 = vpack.c.bf16 %v440, %v439
    %v453 = vpack.c.bf16 %v442, %v441
    %v454 = vpack.c.bf16 %v444, %v443
    %v455 = vpack.c.bf16 %v446, %v445
    %v456 = vpack.c.bf16 %v448, %v447
    %v457 = vld [vmem:[%s5] sm:$0x1]
    %v459 = vlaneseq
    %v460 = vshrl.u32 %v459, 7
    %v461 = vsub.s32 0, %v460
    %v462 = vrot.slane %v457, %v461
    %464 = vmatprep.subr.bf16.mxu0 0
    %465 = vmatpush1.bf16.msra.mxu0 %v449
    %466 = vmatprep.subr.bf16.mxu0 0
    %467 = vmatpush1.bf16.msra.mxu0 %v450
    %468 = vmatprep.subr.bf16.mxu0 0
    %469 = vmatpush1.bf16.msra.mxu0 %v451
    %470 = vmatprep.subr.bf16.mxu0 0
    %471 = vmatpush1.bf16.msra.mxu0 %v452
    %472 = vmatprep.subr.bf16.mxu0 0
    %473 = vmatpush1.bf16.msra.mxu0 %v453
    %474 = vmatprep.subr.bf16.mxu0 0
    %475 = vmatpush1.bf16.msra.mxu0 %v454
    %476 = vmatprep.subr.bf16.mxu0 0
    %477 = vmatpush1.bf16.msra.mxu0 %v455
    %478 = vmatprep.subr.bf16.mxu0 0
    %479 = vmatpush1.bf16.msra.mxu0 %v456
    %480 = vmatprep.subr.bf16.mxu0 0
    %481 = vmatpush1.bf16.msra.mxu0 0
    %482 = vmatprep.subr.bf16.mxu0 0
    %483 = vmatpush1.bf16.msra.mxu0 0
    %484 = vmatprep.subr.bf16.mxu0 0
    %485 = vmatpush1.bf16.msra.mxu0 0
    %486 = vmatprep.subr.bf16.mxu0 0
    %487 = vmatpush1.bf16.msra.mxu0 0
    %488 = vmatprep.subr.bf16.mxu0 0
    %489 = vmatpush1.bf16.msra.mxu0 0
    %490 = vmatprep.subr.bf16.mxu0 0
    %491 = vmatpush1.bf16.msra.mxu0 0
    %492 = vmatprep.subr.bf16.mxu0 0
    %493 = vmatpush1.bf16.msra.mxu0 0
    %494 = vmatprep.subr.bf16.mxu0 0
    %495 = vmatpush1.bf16.msra.mxu0 0
    %496 = vmatprep.mubr.bf16.mxu0 0
    %497 = vmatmul.mubr.bf16.gmra.mrb[0].mxu0 %v425
    %v498 = vpop.f32.mrb[0].mxu0
    %v499 = vadd.f32 %v462, %v498
    %v500 = vpop.f32.mrb[0].mxu0
    %v501 = vpop.f32.mrb[0].mxu0
    %v502 = vadd.f32 %v462, %v501
    %v503 = vpop.f32.mrb[0].mxu0
    %504 = vmatprep.mubr.bf16.mxu0 0
    %505 = vmatmul.mubr.bf16.gmra.mrb[0].mxu0 %v426
    %v506 = vpop.f32.mrb[0].mxu0
    %v507 = vadd.f32 %v462, %v506
    %v508 = vpop.f32.mrb[0].mxu0
    %v509 = vpop.f32.mrb[0].mxu0
    %v510 = vadd.f32 %v462, %v509
    %v511 = vpop.f32.mrb[0].mxu0
    %512 = vmatprep.mubr.bf16.mxu0 0
    %513 = vmatmul.mubr.bf16.gmra.mrb[0].mxu0 %v427
    %v514 = vpop.f32.mrb[0].mxu0
    %v515 = vadd.f32 %v462, %v514
    %v516 = vpop.f32.mrb[0].mxu0
    %v517 = vpop.f32.mrb[0].mxu0
    %v518 = vadd.f32 %v462, %v517
    %v519 = vpop.f32.mrb[0].mxu0
    %520 = vmatprep.mubr.bf16.mxu0 0
    %521 = vmatmul.mubr.bf16.gmra.mrb[0].mxu0 %v428
    %v522 = vpop.f32.mrb[0].mxu0
    %v523 = vadd.f32 %v462, %v522
    %v524 = vpop.f32.mrb[0].mxu0
    %v525 = vpop.f32.mrb[0].mxu0
    %v526 = vadd.f32 %v462, %v525
    %v527 = vpop.f32.mrb[0].mxu0
    %528 = vmatprep.mubr.bf16.mxu0 0
    %529 = vmatmul.mubr.bf16.gmra.mrb[0].mxu0 %v429
    %v530 = vpop.f32.mrb[0].mxu0
    %v531 = vadd.f32 %v462, %v530
    %v532 = vpop.f32.mrb[0].mxu0
    %v533 = vpop.f32.mrb[0].mxu0
    %v534 = vadd.f32 %v462, %v533
    %v535 = vpop.f32.mrb[0].mxu0
    %536 = vmatprep.mubr.bf16.mxu0 0
    %537 = vmatmul.mubr.bf16.gmra.mrb[0].mxu0 %v430
    %v538 = vpop.f32.mrb[0].mxu0
    %v539 = vadd.f32 %v462, %v538
    %v540 = vpop.f32.mrb[0].mxu0
    %v541 = vpop.f32.mrb[0].mxu0
    %v542 = vadd.f32 %v462, %v541
    %v543 = vpop.f32.mrb[0].mxu0
    %544 = vmatprep.mubr.bf16.mxu0 0
    %545 = vmatmul.mubr.bf16.gmra.mrb[0].mxu0 %v431
    %v546 = vpop.f32.mrb[0].mxu0
    %v547 = vadd.f32 %v462, %v546
    %v548 = vpop.f32.mrb[0].mxu0
    %v549 = vpop.f32.mrb[0].mxu0
    %v550 = vadd.f32 %v462, %v549
    %v551 = vpop.f32.mrb[0].mxu0
    %552 = vmatprep.mubr.bf16.mxu0 0
    %553 = vmatmul.mubr.bf16.gmra.mrb[0].mxu0 %v432
    %v554 = vpop.f32.mrb[0].mxu0
    %v555 = vadd.f32 %v462, %v554
    %v556 = vpop.f32.mrb[0].mxu0
    %v557 = vpop.f32.mrb[0].mxu0
    %v558 = vadd.f32 %v462, %v557
    %v559 = vpop.f32.mrb[0].mxu0
    %560 = vdwg.mxu0
    %v561 = vpack.c.bf16 %v502, %v499
    %v562 = vpack.c.bf16 %v510, %v507
    %v563 = vpack.c.bf16 %v518, %v515
    %v564 = vpack.c.bf16 %v526, %v523
    %v565 = vpack.c.bf16 %v534, %v531
    %v566 = vpack.c.bf16 %v542, %v539
    %v567 = vpack.c.bf16 %v550, %v547
    %v568 = vpack.c.bf16 %v558, %v555
    %569 = vmatprep.subr.bf16.mxu0 0
    %570 = vmatpush1.bf16.msra.mxu0 %v561
    %571 = vmatprep.subr.bf16.mxu0 0
    %572 = vmatpush1.bf16.msra.mxu0 %v562
    %573 = vmatprep.subr.bf16.mxu0 0
    %574 = vmatpush1.bf16.msra.mxu0 %v563
    %575 = vmatprep.subr.bf16.mxu0 0
    %576 = vmatpush1.bf16.msra.mxu0 %v564
    %577 = vmatprep.subr.bf16.mxu0 0
    %578 = vmatpush1.bf16.msra.mxu0 %v565
    %579 = vmatprep.subr.bf16.mxu0 0
    %580 = vmatpush1.bf16.msra.mxu0 %v566
    %581 = vmatprep.subr.bf16.mxu0 0
    %582 = vmatpush1.bf16.msra.mxu0 %v567
    %583 = vmatprep.subr.bf16.mxu0 0
    %584 = vmatpush1.bf16.msra.mxu0 %v568
    %585 = vmatprep.subr.bf16.mxu0 0
    %586 = vmatpush1.bf16.msra.mxu0 0
    %587 = vmatprep.subr.bf16.mxu0 0
    %588 = vmatpush1.bf16.msra.mxu0 0
    %589 = vmatprep.subr.bf16.mxu0 0
    %590 = vmatpush1.bf16.msra.mxu0 0
    %591 = vmatprep.subr.bf16.mxu0 0
    %592 = vmatpush1.bf16.msra.mxu0 0
    %593 = vmatprep.subr.bf16.mxu0 0
    %594 = vmatpush1.bf16.msra.mxu0 0
    %595 = vmatprep.subr.bf16.mxu0 0
    %596 = vmatpush1.bf16.msra.mxu0 0
    %597 = vmatprep.subr.bf16.mxu0 0
    %598 = vmatpush1.bf16.msra.mxu0 0
    %599 = vmatprep.subr.bf16.mxu0 0
    %600 = vmatpush1.bf16.msra.mxu0 0
    %601 = vmatprep.mubr.bf16.mxu0 0
    %602 = vmatmul.mubr.bf16.gmra.mrb[0].mxu0 %v96
    %v603 = vpop.f32.mrb[0].mxu0
    %v604 = vadd.f32 0.0, %v603
    %v605 = vpop.f32.mrb[0].mxu0
    %v606 = vpop.f32.mrb[0].mxu0
    %v607 = vadd.f32 0.0, %v606
    %v608 = vpop.f32.mrb[0].mxu0
    %609 = vmatprep.mubr.bf16.mxu0 0
    %610 = vmatmul.mubr.bf16.gmra.mrb[0].mxu0 %v97
    %v611 = vpop.f32.mrb[0].mxu0
    %v612 = vadd.f32 0.0, %v611
    %v613 = vpop.f32.mrb[0].mxu0
    %v614 = vpop.f32.mrb[0].mxu0
    %v615 = vadd.f32 0.0, %v614
    %v616 = vpop.f32.mrb[0].mxu0
    %617 = vmatprep.mubr.bf16.mxu0 0
    %618 = vmatmul.mubr.bf16.gmra.mrb[0].mxu0 %v98
    %v619 = vpop.f32.mrb[0].mxu0
    %v620 = vadd.f32 0.0, %v619
    %v621 = vpop.f32.mrb[0].mxu0
    %v622 = vpop.f32.mrb[0].mxu0
    %v623 = vadd.f32 0.0, %v622
    %v624 = vpop.f32.mrb[0].mxu0
    %625 = vmatprep.mubr.bf16.mxu0 0
    %626 = vmatmul.mubr.bf16.gmra.mrb[0].mxu0 %v99
    %v627 = vpop.f32.mrb[0].mxu0
    %v628 = vadd.f32 0.0, %v627
    %v629 = vpop.f32.mrb[0].mxu0
    %v630 = vpop.f32.mrb[0].mxu0
    %v631 = vadd.f32 0.0, %v630
    %v632 = vpop.f32.mrb[0].mxu0
    %633 = vmatprep.mubr.bf16.mxu0 0
    %634 = vmatmul.mubr.bf16.gmra.mrb[0].mxu0 %v100
    %v635 = vpop.f32.mrb[0].mxu0
    %v636 = vadd.f32 0.0, %v635
    %v637 = vpop.f32.mrb[0].mxu0
    %v638 = vpop.f32.mrb[0].mxu0
    %v639 = vadd.f32 0.0, %v638
    %v640 = vpop.f32.mrb[0].mxu0
    %641 = vmatprep.mubr.bf16.mxu0 0
    %642 = vmatmul.mubr.bf16.gmra.mrb[0].mxu0 %v101
    %v643 = vpop.f32.mrb[0].mxu0
    %v644 = vadd.f32 0.0, %v643
    %v645 = vpop.f32.mrb[0].mxu0
    %v646 = vpop.f32.mrb[0].mxu0
    %v647 = vadd.f32 0.0, %v646
    %v648 = vpop.f32.mrb[0].mxu0
    %649 = vmatprep.mubr.bf16.mxu0 0
    %650 = vmatmul.mubr.bf16.gmra.mrb[0].mxu0 %v102
    %v651 = vpop.f32.mrb[0].mxu0
    %v652 = vadd.f32 0.0, %v651
    %v653 = vpop.f32.mrb[0].mxu0
    %v654 = vpop.f32.mrb[0].mxu0
    %v655 = vadd.f32 0.0, %v654
    %v656 = vpop.f32.mrb[0].mxu0
    %657 = vmatprep.mubr.bf16.mxu0 0
    %658 = vmatmul.mubr.bf16.gmra.mrb[0].mxu0 %v103
    %v659 = vpop.f32.mrb[0].mxu0
    %v660 = vadd.f32 0.0, %v659
    %v661 = vpop.f32.mrb[0].mxu0
    %v662 = vpop.f32.mrb[0].mxu0
    %v663 = vadd.f32 0.0, %v662
    %v664 = vpop.f32.mrb[0].mxu0
    %665 = vdwg.mxu0
    %666 = vst [vmem:[#allocation10] sm:$0xff] %v604
    %667 = vst [vmem:[#allocation10 + $0x8] sm:$0xff] %v607
    %668 = vst [vmem:[#allocation10 + $0x10] sm:$0xff] %v612
    %669 = vst [vmem:[#allocation10 + $0x18] sm:$0xff] %v615
    %670 = vst [vmem:[#allocation10 + $0x20] sm:$0xff] %v620
    %671 = vst [vmem:[#allocation10 + $0x28] sm:$0xff] %v623
    %672 = vst [vmem:[#allocation10 + $0x30] sm:$0xff] %v628
    %673 = vst [vmem:[#allocation10 + $0x38] sm:$0xff] %v631
    %674 = vst [vmem:[#allocation10 + $0x40] sm:$0xff] %v636
    %675 = vst [vmem:[#allocation10 + $0x48] sm:$0xff] %v639
    %676 = vst [vmem:[#allocation10 + $0x50] sm:$0xff] %v644
    %677 = vst [vmem:[#allocation10 + $0x58] sm:$0xff] %v647
    %678 = vst [vmem:[#allocation10 + $0x60] sm:$0xff] %v652
    %679 = vst [vmem:[#allocation10 + $0x68] sm:$0xff] %v655
    %680 = vst [vmem:[#allocation10 + $0x70] sm:$0xff] %v660
    %681 = vst [vmem:[#allocation10 + $0x78] sm:$0xff] %v663
    // Predicated region
    $region42: #{tpu_custom_call.1} parent=1 // pred_check
      _
    $region43: #{tpu_custom_call.1} parent=1 // pred_check_branch
      %683 = sbr.rel (0) target = $region45
    $region44: #{tpu_custom_call.1} parent=1 // pred_region
      %s685 = ssub.s32 2048, 2048
      %686 = vsyncadd [#allocation4], %s685
      %s687 = sshll.u32 [#allocation10], 4
      %s688 = int_to_ptr.vmem [resolvable:$true] %s687
      %693 = dma.vmem_to_hbm [thread:$0]  %s688, 2048, %s6, [#allocation4], 128, 128, 8
    $region45: #{tpu_custom_call.1} parent=1 // pred_fallthru
      _
    // Predicated region
    $region46: #{tpu_custom_call.1} parent=1 // pred_check
      _
    $region47: #{tpu_custom_call.1} parent=1 // pred_check_branch
      %695 = sbr.rel (0) target = $region49
    $region48: #{tpu_custom_call.1} parent=1 // pred_region
      %696 = dma.done [#allocation4], 2048
    $region49: #{tpu_custom_call.1} parent=1 // pred_fallthru
      _
    %697 = vsyncpa [#allocation3], 1
    %698 = vsyncpa [#allocation6], 1
    %699 = vsyncpa [#allocation9], 1
    %700 = vsyncpa [#allocation4], 1

</llo_original>
